<compile_context>
chip_gen: v7x
topology: tpu7x:2x2x1
jax: 0.10.0
libtpu: 0.0.40
codegen_flags: <defaults>
</compile_context>

<pallas_src>
import jax
import jax.numpy as jnp
from jax.experimental import pallas as pl
from jax.experimental.pallas import tpu as pltpu


def linear_relu_kernel(x_ref, w_ref, b_ref, o_ref):
    # x_ref: [B, IN], w_ref: [IN, OUT], b_ref: [1, OUT], o_ref: [B, OUT]
    x = x_ref[...]
    w = w_ref[...]
    y = b_ref[...]                       # [1, OUT] -> broadcasts over batch
    # Unrolled K-contraction on the VPU: 4 broadcast multiply-adds.
    for k in range(x.shape[1]):
        y = y + x[:, k:k + 1] * w[k:k + 1, :]   # [B,1] * [1,OUT] -> [B,OUT]
    o_ref[...] = jnp.maximum(y, 0.0)


def dqn_single_forward(x, weight, bias):
    """Pallas implementation of DQN_single.forward: ReLU(Linear(4,4)(x)).

    x      : [B, 4]  float32
    weight : [4, 4]  float32  (PyTorch layout: [out_features, in_features])
    bias   : [4]     float32
    """
    B, IN = x.shape
    OUT = weight.shape[0]
    w_t = weight.T                  # [IN, OUT]; trivial 4x4 host-side reshuffle
    b2d = bias.reshape(1, OUT)      # 2-D for TPU layout

    # Single invocation: no grid, whole arrays resident in VMEM.
    return pl.pallas_call(
        linear_relu_kernel,
        out_shape=jax.ShapeDtypeStruct((B, OUT), x.dtype),
        in_specs=[
            pl.BlockSpec(memory_space=pltpu.MemorySpace.VMEM),
            pl.BlockSpec(memory_space=pltpu.MemorySpace.VMEM),
            pl.BlockSpec(memory_space=pltpu.MemorySpace.VMEM),
        ],
        out_specs=pl.BlockSpec(memory_space=pltpu.MemorySpace.VMEM),
    )(x, w_t, b2d)


if __name__ == "__main__":
    key = jax.random.PRNGKey(0)
    k_x, k_w, k_b = jax.random.split(key, 3)

    B, IN, OUT = 8, 4, 4
    x = jax.random.normal(k_x, (B, IN), dtype=jnp.float32)

    # Deterministic parameter init mimicking nn.Linear default
    # (uniform in [-1/sqrt(in), 1/sqrt(in)]).
    bound = 1.0 / (IN ** 0.5)
    weight = jax.random.uniform(k_w, (OUT, IN), dtype=jnp.float32,
                                minval=-bound, maxval=bound)
    bias = jax.random.uniform(k_b, (OUT,), dtype=jnp.float32,
                              minval=-bound, maxval=bound)

    out = jax.block_until_ready(dqn_single_forward(x, weight, bias))

    # Reference check in plain JAX.
    ref = jnp.maximum(x @ weight.T + bias, 0.0)
    assert out.shape == (B, OUT)
    assert jnp.allclose(out, ref, atol=1e-5, rtol=1e-5)

    print("KERNEL_OK")
</pallas_src>

<mosaic_0001>
module attributes {stable_mosaic.version = 11 : i64} {
  func.func @linear_relu_kernel(%arg0: memref<8x4xf32, #tpu.memory_space<vmem>>, %arg1: memref<4x4xf32, #tpu.memory_space<vmem>>, %arg2: memref<1x4xf32, #tpu.memory_space<vmem>>, %arg3: memref<8x4xf32, #tpu.memory_space<vmem>>) attributes {dimension_semantics = [], scalar_prefetch = 0 : i64, scratch_operands = 0 : i64, tpu.core_type = #tpu.core_type<tc>} {
    %c0 = arith.constant 0 : index
    %c0_0 = arith.constant 0 : index
    %0 = vector.load %arg0[%c0, %c0_0] : memref<8x4xf32, #tpu.memory_space<vmem>>, vector<8x4xf32>
    %c0_1 = arith.constant 0 : index
    %c0_2 = arith.constant 0 : index
    %1 = vector.load %arg1[%c0_1, %c0_2] : memref<4x4xf32, #tpu.memory_space<vmem>>, vector<4x4xf32>
    %c0_3 = arith.constant 0 : index
    %c0_4 = arith.constant 0 : index
    %2 = vector.load %arg2[%c0_3, %c0_4] : memref<1x4xf32, #tpu.memory_space<vmem>>, vector<1x4xf32>
    %3 = vector.extract_strided_slice %0 {offsets = [0, 0], sizes = [8, 1], strides = [1, 1]} : vector<8x4xf32> to vector<8x1xf32>
    %4 = vector.extract_strided_slice %1 {offsets = [0, 0], sizes = [1, 4], strides = [1, 1]} : vector<4x4xf32> to vector<1x4xf32>
    %5 = vector.broadcast %3 : vector<8x1xf32> to vector<8x4xf32>
    %6 = vector.broadcast %4 : vector<1x4xf32> to vector<8x4xf32>
    %7 = arith.mulf %5, %6 : vector<8x4xf32>
    %8 = vector.broadcast %2 : vector<1x4xf32> to vector<8x4xf32>
    %9 = arith.addf %8, %7 : vector<8x4xf32>
    %10 = vector.extract_strided_slice %0 {offsets = [0, 1], sizes = [8, 1], strides = [1, 1]} : vector<8x4xf32> to vector<8x1xf32>
    %11 = vector.extract_strided_slice %1 {offsets = [1, 0], sizes = [1, 4], strides = [1, 1]} : vector<4x4xf32> to vector<1x4xf32>
    %12 = vector.broadcast %10 : vector<8x1xf32> to vector<8x4xf32>
    %13 = vector.broadcast %11 : vector<1x4xf32> to vector<8x4xf32>
    %14 = arith.mulf %12, %13 : vector<8x4xf32>
    %15 = arith.addf %9, %14 : vector<8x4xf32>
    %16 = vector.extract_strided_slice %0 {offsets = [0, 2], sizes = [8, 1], strides = [1, 1]} : vector<8x4xf32> to vector<8x1xf32>
    %17 = vector.extract_strided_slice %1 {offsets = [2, 0], sizes = [1, 4], strides = [1, 1]} : vector<4x4xf32> to vector<1x4xf32>
    %18 = vector.broadcast %16 : vector<8x1xf32> to vector<8x4xf32>
    %19 = vector.broadcast %17 : vector<1x4xf32> to vector<8x4xf32>
    %20 = arith.mulf %18, %19 : vector<8x4xf32>
    %21 = arith.addf %15, %20 : vector<8x4xf32>
    %22 = vector.extract_strided_slice %0 {offsets = [0, 3], sizes = [8, 1], strides = [1, 1]} : vector<8x4xf32> to vector<8x1xf32>
    %23 = vector.extract_strided_slice %1 {offsets = [3, 0], sizes = [1, 4], strides = [1, 1]} : vector<4x4xf32> to vector<1x4xf32>
    %24 = vector.broadcast %22 : vector<8x1xf32> to vector<8x4xf32>
    %25 = vector.broadcast %23 : vector<1x4xf32> to vector<8x4xf32>
    %26 = arith.mulf %24, %25 : vector<8x4xf32>
    %27 = arith.addf %21, %26 : vector<8x4xf32>
    %cst = arith.constant 0.000000e+00 : f32
    %28 = vector.broadcast %cst : f32 to vector<8x4xf32>
    %29 = arith.maximumf %27, %28 : vector<8x4xf32>
    %c0_5 = arith.constant 0 : index
    %c0_6 = arith.constant 0 : index
    %30 = vector.load %arg3[%c0_5, %c0_6] : memref<8x4xf32, #tpu.memory_space<vmem>>, vector<8x4xf32>
    tpu.vector_store %arg3[%c0_5, %c0_6], %29 {strides = array<i32>} : memref<8x4xf32, #tpu.memory_space<vmem>>, vector<8x4xf32>,
    return
  }
}

</mosaic_0001>

<llo_original>
// kernel: tpu_custom_call.1
$region0: #{tpu_custom_call.1}
  #allocation0 [shape = 'u32[]', space=smem, size = 0x4, offset = 0x4, fixed_abs, tag = 'smem constant byte address 0x4 - core index']
  #allocation1 [shape = 'u32[144,128]{1,0:T(1,128)}', space=vmem, size = 0x12000, scoped, tag = 'internal scratch']
  %s0 = inlined_call_operand.vmem [shape: f32[8,4], index: 0, kind: input, shape index: {}]
  %s1 = inlined_call_operand.vmem [shape: f32[4,4], index: 1, kind: input, shape index: {}]
  %s2 = inlined_call_operand.vmem [shape: f32[1,4], index: 2, kind: input, shape index: {}]
  %s3 = inlined_call_operand.vmem [shape: f32[8,4], index: 3, kind: output, shape index: {}]
  %s4 = sld [smem:[#allocation0]]
  $region22: #{tpu_custom_call.1} parent=0
    _
  %s6 = ssub.s32 1, %s4
  %s7 = scalar_select 0, %s6, %s4
  // Predicated region
  $region2: #{tpu_custom_call.1} parent=0 // pred_check
    _
  $region3: #{tpu_custom_call.1} parent=0 // pred_check_branch
    %9 = sbr.rel (0) target = $region5
  $region4: #{tpu_custom_call.1} parent=0 // pred_region
    _
  $region5: #{tpu_custom_call.1} parent=0 // pred_fallthru
    _
  // Predicated region
  $region6: #{tpu_custom_call.1} parent=0 // pred_check
    _
  $region7: #{tpu_custom_call.1} parent=0 // pred_check_branch
    %11 = sbr.rel (0) target = $region9
  $region8: #{tpu_custom_call.1} parent=0 // pred_region
    _
  $region9: #{tpu_custom_call.1} parent=0 // pred_fallthru
    _
  // Predicated region
  $region10: #{tpu_custom_call.1} parent=0 // pred_check
    _
  $region11: #{tpu_custom_call.1} parent=0 // pred_check_branch
    %13 = sbr.rel (0) target = $region13
  $region12: #{tpu_custom_call.1} parent=0 // pred_region
    _
  $region13: #{tpu_custom_call.1} parent=0 // pred_fallthru
    _
  %v14 = vld [vmem:[%s0] sm:$0xff]
  %v15 = vld [vmem:[%s1] sm:$0xf]
  %v16 = vld [vmem:[%s2] sm:$0x1]
  %18 = vset.pattern.permute.xlu0 0
  %19 = vperm.xlu0 %18, %v14
  %v20 = vpop.permute.xlu0 %19
  %v22 = vlaneseq
  %v23 = vshrl.u32 %v22, 7
  %v24 = vsub.s32 0, %v23
  %v25 = vrot.slane %v15, %v24
  %v26 = vmul.f32 %v20, %v25
  %v28 = vlaneseq
  %v29 = vshrl.u32 %v28, 7
  %v30 = vsub.s32 0, %v29
  %v31 = vrot.slane %v16, %v30
  %v33 = vadd.f32 %v31, %v26
  %34 = vset.pattern.permute.xlu0 1
  %35 = vperm.xlu0 %34, %v14
  %v36 = vpop.permute.xlu0 %35
  %v38 = vlaneseq
  %v39 = vshrl.u32 %v38, 7
  %v40 = vsub.s32 1, %v39
  %v41 = vrot.slane %v15, %v40
  %v42 = vmul.f32 %v36, %v41
  %v43 = vadd.f32 %v33, %v42
  %44 = vset.pattern.permute.xlu0 2
  %45 = vperm.xlu0 %44, %v14
  %v46 = vpop.permute.xlu0 %45
  %v48 = vlaneseq
  %v49 = vshrl.u32 %v48, 7
  %v50 = vsub.s32 2, %v49
  %v51 = vrot.slane %v15, %v50
  %v52 = vmul.f32 %v46, %v51
  %v53 = vadd.f32 %v43, %v52
  %54 = vset.pattern.permute.xlu0 3
  %55 = vperm.xlu0 %54, %v14
  %v56 = vpop.permute.xlu0 %55
  %v58 = vlaneseq
  %v59 = vshrl.u32 %v58, 7
  %v60 = vsub.s32 3, %v59
  %v61 = vrot.slane %v15, %v60
  %v62 = vmul.f32 %v56, %v61
  %v63 = vadd.f32 %v53, %v62
  %v64 = vmax.f32 %v63, 0.0
  %vm65 = vcmask 31744
  %66 = vst.msk [vmem:[%s3] sm:$0xff] %vm65, %v64
  // Predicated region
  $region14: #{tpu_custom_call.1} parent=0 // pred_check
    _
  $region15: #{tpu_custom_call.1} parent=0 // pred_check_branch
    %68 = sbr.rel (0) target = $region17
  $region16: #{tpu_custom_call.1} parent=0 // pred_region
    _
  $region17: #{tpu_custom_call.1} parent=0 // pred_fallthru
    _
  // Predicated region
  $region18: #{tpu_custom_call.1} parent=0 // pred_check
    _
  $region19: #{tpu_custom_call.1} parent=0 // pred_check_branch
    %70 = sbr.rel (0) target = $region21
  $region20: #{tpu_custom_call.1} parent=0 // pred_region
    _
  $region21: #{tpu_custom_call.1} parent=0 // pred_fallthru
    _

</llo_original>
